<compile_context>
chip_gen: v7x
topology: tpu7x:2x2x1
jax: 0.10.0
libtpu: 0.0.40
codegen_flags: <defaults>
</compile_context>

<pallas_src>
import functools
import math

import jax
import jax.numpy as jnp
from jax import lax
from jax.experimental import pallas as pl
from jax.experimental.pallas import tpu as pltpu

_LANES = 128
_ACC_ROWS = 32                      # partial-sum tile height (VALU ILP + int8 tile multiple)
# torch.isclose defaults: atol=1e-8, rtol=1e-5
_ISCLOSE_ZERO = 1.0e-8              # |w - 0| <= atol
_ISCLOSE_ONE = 1.0e-8 + 1.0e-5      # |w - 1| <= atol + rtol*|1|
_VMEM_LIMIT = 32 * 1024 * 1024      # explicit: v5e's default scoped limit is only 16 MiB
_VMEM_INPUT_BUDGET = 24 * 1024 * 1024   # double-buffered input blocks must fit in here


def _round_up(x: int, m: int) -> int:
    return ((x + m - 1) // m) * m


def _focal_loss_kernel(*refs, alpha: float, gamma: float, pw_mode: str,
                       valid_rows, block_rows: int):
    """One grid step == one (block_rows, 128) slab; writes a (32, 128) partial sum."""
    if pw_mode == "dense":
        w_ref, code_ref, pw_ref, sum_ref, cnt_ref = refs
    else:
        w_ref, code_ref, sum_ref, cnt_ref = refs
        pw_ref = None

    w = w_ref[...]                                        # (TM,128) f32 predicted prob

    # The last block may extend past the array: OOB rows hold unspecified data
    # (possibly NaN).  Force them to w=0 so the isclose(w,0) mask drops them.
    if valid_rows is not None:
        row = pl.program_id(0) * block_rows + lax.broadcasted_iota(
            jnp.int32, w.shape, 0)
        w = jnp.where(row < valid_rows, w, 0.0)

    # Outlier mask: ~(isclose(w,0) | isclose(w,1)); in-row padding also uses w=0.
    keep = jnp.logical_not(
        (jnp.abs(w) <= _ISCLOSE_ZERO) | (jnp.abs(w - 1.0) <= _ISCLOSE_ONE))

    code = code_ref[...].astype(jnp.int32)                # int8 {0,1,2,3} -> i32
    is_pos = (code & 1) != 0                              # bit 0 == target y

    one_m_w = 1.0 - w
    p_t = jnp.where(is_pos, w, one_m_w)                   # prob of the true class

    # -weight folded in (saves a negate); exact for binary y / pos_weight.
    if pw_mode == "none":                                 # pos_weight == 1 everywhere
        neg_weight = jnp.where(is_pos, -alpha, -(1.0 - alpha))
    elif pw_mode == "packed":                             # pos_weight lives in bit 1
        pw_f = (code >> 1).astype(jnp.float32)
        neg_weight = jnp.where(is_pos, -alpha * pw_f, -(1.0 - alpha))
    else:                                                 # general f32 pos_weight stream
        neg_weight = jnp.where(is_pos, -alpha * pw_ref[...], -(1.0 - alpha))

    one_m_pt = 1.0 - p_t
    if gamma == 0.0:
        focal = jnp.ones_like(one_m_pt)
    elif gamma == 1.0:
        focal = one_m_pt
    elif gamma == 2.0:
        focal = one_m_pt * one_m_pt                       # default gamma: VPU square
    else:
        focal = jnp.power(one_m_pt, gamma)

    per_elem = neg_weight * focal * jnp.log(p_t)          # one EUP log per element
    loss = jnp.where(keep, per_elem, 0.0)                 # select kills inf/NaN at masked w

    # Lane-dense partial sums: pure VALU adds with 4-vreg ILP per accumulator.
    sum_ref[...] = loss.reshape(-1, _ACC_ROWS, _LANES).sum(axis=0)
    cnt_ref[...] = keep.astype(jnp.float32).reshape(-1, _ACC_ROWS, _LANES).sum(axis=0)


def binary_focal_loss(*, inpt, target, alpha: float = 0.25, gamma: float = 2.0,
                      pos_weight=None, pos_weight_is_binary: bool = False,
                      block_rows: int = 8192):
    """Masked-mean binary focal loss via a tiled Pallas partial-sum kernel.

    `target` must be binary (as in the tracking module).  `pos_weight_is_binary=True`
    enables the packed int8 fast path (exact only for {0,1} pos_weight); the default
    keeps a full-precision f32 pos_weight stream for arbitrary user pos_weight.
    """
    assert gamma >= 0.0
    assert 0.0 <= alpha <= 1.0
    # TODO(synk): the torch version host-asserts no-NaN inputs and logs a warning when
    # outliers are masked; those host-side data inspections are not reproduced here.
    w = jnp.asarray(inpt, jnp.float32).reshape(-1)
    y = jnp.asarray(target).reshape(-1)

    n = int(w.shape[0])
    rows = -(-n // _LANES)                      # true rows after 128-lane packing
    n_pad = rows * _LANES

    if pos_weight is None:
        pw_mode = "none"
    elif pos_weight_is_binary:
        pw_mode = "packed"
    else:
        pw_mode = "dense"

    # Block rows: as large as possible (amortise the ~0.35us/step pipeline cost),
    # rounded to the int8 (32,128) tile, capped so the double-buffered input blocks
    # stay comfortably inside the explicit 32 MiB scoped-VMEM limit on every chip.
    bytes_per_row = _LANES * (4 + 1 + (4 if pw_mode == "dense" else 0))
    max_tm = max(_ACC_ROWS,
                 (_VMEM_INPUT_BUDGET // (2 * bytes_per_row)) // _ACC_ROWS * _ACC_ROWS)
    tm = _round_up(min(int(block_rows), _round_up(rows, _ACC_ROWS)), _ACC_ROWS)
    tm = max(_ACC_ROWS, min(tm, max_tm))
    num_blocks = -(-rows // tm)

    def to_tiles(x):
        if n_pad != n:                          # pad only to 128-lane granularity
            x = jnp.pad(x, (0, n_pad - n))      # w padded with 0 -> masked as outlier
        return x.reshape(rows, _LANES)

    # TODO(synk): accepting pre-padded (rows,128) w/code from upstream would remove the
    # remaining wrapper pad/cast pass entirely; the 1-D module interface forces it here.
    y_bit = jnp.where(y > 0.5, 1, 0).astype(jnp.int8)
    if pw_mode == "packed":
        pw_bit = jnp.where(jnp.asarray(pos_weight).reshape(-1) > 0.5, 2, 0).astype(jnp.int8)
        code = y_bit | pw_bit
    else:
        code = y_bit

    operands = [to_tiles(w), to_tiles(code)]
    in_specs = [pl.BlockSpec((tm, _LANES), lambda i: (i, 0)),
                pl.BlockSpec((tm, _LANES), lambda i: (i, 0))]
    if pw_mode == "dense":
        operands.append(to_tiles(jnp.asarray(pos_weight, jnp.float32).reshape(-1)))
        in_specs.append(pl.BlockSpec((tm, _LANES), lambda i: (i, 0)))

    kernel = functools.partial(
        _focal_loss_kernel, alpha=float(alpha), gamma=float(gamma), pw_mode=pw_mode,
        valid_rows=(rows if rows % tm != 0 else None), block_rows=tm)

    acc = jax.ShapeDtypeStruct((num_blocks * _ACC_ROWS, _LANES), jnp.float32)
    out_sum, out_cnt = pl.pallas_call(
        kernel,
        out_shape=(acc, acc),
        grid_spec=pltpu.PrefetchScalarGridSpec(
            num_scalar_prefetch=0,
            grid=(num_blocks,),
            in_specs=in_specs,
            out_specs=(pl.BlockSpec((_ACC_ROWS, _LANES), lambda i: (i, 0)),
                       pl.BlockSpec((_ACC_ROWS, _LANES), lambda i: (i, 0))),
        ),
        compiler_params=pltpu.CompilerParams(
            dimension_semantics=("parallel",),   # independent blocks: v7x uses both TCs
            vmem_limit_bytes=_VMEM_LIMIT,
        ),
    )(*operands)

    # Tiny final reduction + divide stays in XLA (keeps the kernel grid parallel).
    # If every element is an outlier this is 0/0 == NaN, matching torch semantics.
    # TODO(synk): no custom_vjp — jax.grad through this loss is not supported.
    return jnp.sum(out_sum) / jnp.sum(out_cnt)


def falsify_low_pt_edges(*, y, edge_index=None, pt=None, pt_thld: float = 0.0):
    """Ground-truth modification: edges touching a low-pt hit become false."""
    if math.isclose(pt_thld, 0.0):
        return y
    assert edge_index is not None
    assert pt is not None
    # TODO(synk): the data-dependent gather pt[edge_index[0]] stays in XLA; a
    # rectangular Pallas BlockSpec cannot express it.
    return (jnp.asarray(y).astype(bool) & (pt[edge_index[0, :]] > pt_thld)).astype(jnp.int32)


class HaughtyFocalLoss:
    """JAX/Pallas port of gnn_tracking.metrics.losses.HaughtyFocalLoss (forward only)."""

    def __init__(self, *, alpha: float = 0.25, gamma: float = 2.0,
                 pt_thld: float = 0.0, block_rows: int = 8192):
        self._alpha = float(alpha)
        self._gamma = float(gamma)
        self._pt_thld = float(pt_thld)
        self._block_rows = int(block_rows)

    def __call__(self, *, w, y, edge_index, pt, **kwargs):
        pos_weight = falsify_low_pt_edges(
            y=y, edge_index=edge_index, pt=pt, pt_thld=self._pt_thld)
        # pos_weight is {0,1}-valued here -> packed int8 fast path is exact.
        return binary_focal_loss(
            inpt=w, target=y, alpha=self._alpha, gamma=self._gamma,
            pos_weight=pos_weight, pos_weight_is_binary=True,
            block_rows=self._block_rows)


def _reference_focal(w, y, pw, alpha, gamma):
    """Plain-JAX transcription of torch _binary_focal_loss (both-logs form)."""
    w = jnp.asarray(w, jnp.float32)
    y = jnp.asarray(y, jnp.float32)
    pw = jnp.asarray(pw, jnp.float32)
    mask = ~((jnp.abs(w) <= _ISCLOSE_ZERO) | (jnp.abs(w - 1.0) <= _ISCLOSE_ONE))
    pos_term = -alpha * pw * jnp.power(1.0 - w, gamma) * y * jnp.log(w)
    neg_term = -(1.0 - alpha) * jnp.power(w, gamma) * (1.0 - y) * jnp.log(1.0 - w)
    loss = jnp.where(mask, pos_term + neg_term, 0.0)
    return jnp.sum(loss) / jnp.sum(mask)


if __name__ == "__main__":
    key = jax.random.PRNGKey(0)
    # 9000 edges: not a multiple of 128 (in-row padding), rows=71 -> with block_rows=32
    # the grid has 3 steps and a partial last block (exercises the OOB row mask).
    n_edges = 9000
    n_hits = 512

    k1, k2, k3, k4, k5 = jax.random.split(key, 5)
    logits = jax.random.normal(k1, (n_edges,), jnp.float32)
    w = jax.nn.sigmoid(logits)
    # Inject exact outliers that torch's isclose mask drops.
    w = w.at[0].set(0.0).at[1].set(1.0).at[2].set(1.0 - 5e-6)
    y = (jax.random.uniform(k2, (n_edges,)) > 0.5).astype(jnp.float32)
    edge_index = jax.random.randint(k3, (2, n_edges), 0, n_hits)
    pt = jax.random.uniform(k4, (n_hits,), jnp.float32, minval=0.1, maxval=5.0)

    # HaughtyFocalLoss (packed y/pos_weight path), small blocks -> multi-step grid.
    for pt_thld in (0.0, 1.0):
        loss_fn = HaughtyFocalLoss(alpha=0.25, gamma=2.0, pt_thld=pt_thld, block_rows=32)
        got = jax.block_until_ready(loss_fn(w=w, y=y, edge_index=edge_index, pt=pt))
        pw_ref = jnp.asarray(
            falsify_low_pt_edges(y=y, edge_index=edge_index, pt=pt, pt_thld=pt_thld),
            jnp.float32)
        ref = _reference_focal(w, y, pw_ref, 0.25, 2.0)
        assert jnp.allclose(got, ref, rtol=1e-4, atol=1e-6), (pt_thld, got, ref)
        assert jnp.isfinite(got), (pt_thld, got)

    # pos_weight=None path (no pos_weight stream at all).
    got = jax.block_until_ready(binary_focal_loss(inpt=w, target=y, block_rows=32))
    ref = _reference_focal(w, y, jnp.ones_like(w), 0.25, 2.0)
    assert jnp.allclose(got, ref, rtol=1e-4, atol=1e-6), (got, ref)

    # General (non-binary) pos_weight path: dense f32 stream, no int8 packing.
    pw_dense = jax.random.uniform(k5, (n_edges,), jnp.float32, minval=0.5, maxval=2.0)
    got = jax.block_until_ready(binary_focal_loss(
        inpt=w, target=y, pos_weight=pw_dense, pos_weight_is_binary=False, block_rows=32))
    ref = _reference_focal(w, y, pw_dense, 0.25, 2.0)
    assert jnp.allclose(got, ref, rtol=1e-4, atol=1e-6), (got, ref)

    # Default large-block configuration (single grid step, partial block) runs too.
    loss_fn = HaughtyFocalLoss(alpha=0.25, gamma=2.0, pt_thld=1.0)
    got = jax.block_until_ready(loss_fn(w=w, y=y, edge_index=edge_index, pt=pt))
    assert jnp.isfinite(got), got

    print("KERNEL_OK")
</pallas_src>

<mosaic_0001>
module attributes {stable_mosaic.version = 11 : i64} {
  func.func @_focal_loss_kernel(%arg0: i32, %arg1: memref<32x128xf32, #tpu.memory_space<vmem>>, %arg2: memref<32x128xi8, #tpu.memory_space<vmem>>, %arg3: memref<32x128xf32, #tpu.memory_space<vmem>>, %arg4: memref<32x128xf32, #tpu.memory_space<vmem>>) attributes {dimension_semantics = [#tpu.dimension_semantics<parallel>], iteration_bounds = array<i64: 3>, scalar_prefetch = 0 : i64, scratch_operands = 0 : i64, tpu.core_type = #tpu.core_type<tc>, window_params = [{transform_indices = @transform_0, window_bounds = array<i64: 32, 128>}, {transform_indices = @transform_1, window_bounds = array<i64: 32, 128>}, {transform_indices = @transform_2, window_bounds = array<i64: 32, 128>}, {transform_indices = @transform_3, window_bounds = array<i64: 32, 128>}]} {
    %c0 = arith.constant 0 : index
    %c0_0 = arith.constant 0 : index
    %0 = vector.load %arg1[%c0, %c0_0] : memref<32x128xf32, #tpu.memory_space<vmem>>, vector<32x128xf32>
    %c32_i32 = arith.constant 32 : i32
    %1 = arith.muli %arg0, %c32_i32 : i32
    %2 = tpu.iota {dimensions = array<i32: 0>} : vector<32x128xi32>
    %3 = vector.broadcast %1 : i32 to vector<32x128xi32>
    %4 = arith.addi %3, %2 : vector<32x128xi32>
    %c71_i32 = arith.constant 71 : i32
    %5 = vector.broadcast %c71_i32 : i32 to vector<32x128xi32>
    %6 = arith.cmpi slt, %4, %5 : vector<32x128xi32>
    %cst = arith.constant 0.000000e+00 : f32
    %7 = vector.broadcast %cst : f32 to vector<32x128xf32>
    %8 = arith.select %6, %0, %7 : vector<32x128xi1>, vector<32x128xf32>
    %9 = math.absf %8 : vector<32x128xf32>
    %cst_1 = arith.constant 9.99999993E-9 : f32
    %10 = vector.broadcast %cst_1 : f32 to vector<32x128xf32>
    %11 = arith.cmpf ole, %9, %10 : vector<32x128xf32>
    %cst_2 = arith.constant 1.000000e+00 : f32
    %12 = vector.broadcast %cst_2 : f32 to vector<32x128xf32>
    %13 = arith.subf %8, %12 : vector<32x128xf32>
    %14 = math.absf %13 : vector<32x128xf32>
    %cst_3 = arith.constant 1.001000e-05 : f32
    %15 = vector.broadcast %cst_3 : f32 to vector<32x128xf32>
    %16 = arith.cmpf ole, %14, %15 : vector<32x128xf32>
    %17 = arith.ori %11, %16 : vector<32x128xi1>
    %cst_4 = arith.constant dense<true> : vector<32x128xi1>
    %18 = arith.xori %17, %cst_4 : vector<32x128xi1>
    %c0_5 = arith.constant 0 : index
    %c0_6 = arith.constant 0 : index
    %19 = vector.load %arg2[%c0_5, %c0_6] : memref<32x128xi8, #tpu.memory_space<vmem>>, vector<32x128xi8>
    %20 = arith.extsi %19 : vector<32x128xi8> to vector<32x128xi32>
    %c1_i32 = arith.constant 1 : i32
    %21 = vector.broadcast %c1_i32 : i32 to vector<32x128xi32>
    %22 = arith.andi %20, %21 : vector<32x128xi32>
    %c0_i32 = arith.constant 0 : i32
    %23 = vector.broadcast %c0_i32 : i32 to vector<32x128xi32>
    %24 = arith.cmpi ne, %22, %23 : vector<32x128xi32>
    %cst_7 = arith.constant 1.000000e+00 : f32
    %25 = vector.broadcast %cst_7 : f32 to vector<32x128xf32>
    %26 = arith.subf %25, %8 : vector<32x128xf32>
    %27 = arith.select %24, %8, %26 : vector<32x128xi1>, vector<32x128xf32>
    %c1_i32_8 = arith.constant 1 : i32
    %28 = vector.broadcast %c1_i32_8 : i32 to vector<32x128xi32>
    %29 = arith.shrsi %20, %28 : vector<32x128xi32>
    %30 = arith.sitofp %29 : vector<32x128xi32> to vector<32x128xf32>
    %cst_9 = arith.constant -2.500000e-01 : f32
    %31 = vector.broadcast %cst_9 : f32 to vector<32x128xf32>
    %32 = arith.mulf %31, %30 : vector<32x128xf32>
    %cst_10 = arith.constant -7.500000e-01 : f32
    %33 = vector.broadcast %cst_10 : f32 to vector<32x128xf32>
    %34 = arith.select %24, %32, %33 : vector<32x128xi1>, vector<32x128xf32>
    %cst_11 = arith.constant 1.000000e+00 : f32
    %35 = vector.broadcast %cst_11 : f32 to vector<32x128xf32>
    %36 = arith.subf %35, %27 : vector<32x128xf32>
    %37 = arith.mulf %36, %36 : vector<32x128xf32>
    %38 = arith.mulf %34, %37 : vector<32x128xf32>
    %39 = math.log %27 : vector<32x128xf32>
    %40 = arith.mulf %38, %39 : vector<32x128xf32>
    %cst_12 = arith.constant 0.000000e+00 : f32
    %41 = vector.broadcast %cst_12 : f32 to vector<32x128xf32>
    %42 = arith.select %18, %40, %41 : vector<32x128xi1>, vector<32x128xf32>
    %43 = vector.shape_cast %42 : vector<32x128xf32> to vector<1x32x128xf32>
    %cst_13 = arith.constant dense<0.000000e+00> : vector<32x128xf32>
    %44 = vector.multi_reduction <add>, %43, %cst_13 [0] : vector<1x32x128xf32> to vector<32x128xf32>
    %c0_14 = arith.constant 0 : index
    %c0_15 = arith.constant 0 : index
    %45 = vector.load %arg3[%c0_14, %c0_15] : memref<32x128xf32, #tpu.memory_space<vmem>>, vector<32x128xf32>
    tpu.vector_store %arg3[%c0_14, %c0_15], %44 {strides = array<i32>} : memref<32x128xf32, #tpu.memory_space<vmem>>, vector<32x128xf32>,
    %46 = arith.extui %18 : vector<32x128xi1> to vector<32x128xi32>
    %47 = arith.sitofp %46 : vector<32x128xi32> to vector<32x128xf32>
    %48 = vector.shape_cast %47 : vector<32x128xf32> to vector<1x32x128xf32>
    %cst_16 = arith.constant dense<0.000000e+00> : vector<32x128xf32>
    %49 = vector.multi_reduction <add>, %48, %cst_16 [0] : vector<1x32x128xf32> to vector<32x128xf32>
    %c0_17 = arith.constant 0 : index
    %c0_18 = arith.constant 0 : index
    %50 = vector.load %arg4[%c0_17, %c0_18] : memref<32x128xf32, #tpu.memory_space<vmem>>, vector<32x128xf32>
    tpu.vector_store %arg4[%c0_17, %c0_18], %49 {strides = array<i32>} : memref<32x128xf32, #tpu.memory_space<vmem>>, vector<32x128xf32>,
    return
  }
  func.func @transform_0(%arg0: i32) -> (i32, i32) {
    %c0_i32 = arith.constant 0 : i32
    %c0_i32_0 = arith.constant 0 : i32
    return %arg0, %c0_i32 : i32, i32
  }
  func.func @transform_1(%arg0: i32) -> (i32, i32) {
    %c0_i32 = arith.constant 0 : i32
    %c0_i32_0 = arith.constant 0 : i32
    return %arg0, %c0_i32 : i32, i32
  }
  func.func @transform_2(%arg0: i32) -> (i32, i32) {
    %c0_i32 = arith.constant 0 : i32
    %c0_i32_0 = arith.constant 0 : i32
    return %arg0, %c0_i32 : i32, i32
  }
  func.func @transform_3(%arg0: i32) -> (i32, i32) {
    %c0_i32 = arith.constant 0 : i32
    %c0_i32_0 = arith.constant 0 : i32
    return %arg0, %c0_i32 : i32, i32
  }
}

</mosaic_0001>

<llo_original>
// kernel: tpu_custom_call.1
$region0: #{tpu_custom_call.1}
  #allocation0 [shape = 'u32[]', space=smem, size = 0x4, offset = 0x4, fixed_abs, tag = 'smem constant byte address 0x4 - core index']
  #allocation1 [shape = 'u32[144,128]{1,0:T(1,128)}', space=vmem, size = 0x12000, scoped, tag = 'internal scratch']
  %s0 = inlined_call_operand.hbm [shape: f32[71,128], index: 0, kind: input, shape index: {}]
  %s1 = inlined_call_operand.hbm [shape: s8[71,128], index: 1, kind: input, shape index: {}]
  %s2 = inlined_call_operand.hbm [shape: f32[96,128], index: 2, kind: output, shape index: {0}]
  %s3 = inlined_call_operand.hbm [shape: f32[96,128], index: 3, kind: output, shape index: {1}]
  %4 = xla_tuple %s2, %s3
  %s5 = sld [smem:[#allocation0]]
  $region57: #{tpu_custom_call.1} parent=0
    _
  %s7 = ssub.s32 1, %s5
  %s8 = scalar_select 0, %s7, %s5
  $region1: #{tpu_custom_call.1} parent=0
    #allocation2 [shape = 'u8[32768]{0}', space=vmem, size = 0x8000, scoped, tag = 'input window, operand 0']
    #allocation3 [shape = 's32[2]{0}', space=sflag, size = 0x8, scoped, tag = 'scoped memory for tpu_custom_call.1']
    #allocation4 [shape = 's32[2]{0}', space=sflag, size = 0x8, scoped, tag = 'scoped memory for tpu_custom_call.1']
    #allocation5 [shape = 'u8[8192]{0}', space=vmem, size = 0x2000, scoped, tag = 'input window, operand 1']
    #allocation6 [shape = 's32[2]{0}', space=sflag, size = 0x8, scoped, tag = 'scoped memory for tpu_custom_call.1']
    #allocation7 [shape = 'u8[32768]{0}', space=vmem, size = 0x8000, scoped, tag = 'output window, operand 0']
    #allocation8 [shape = 'u8[32768]{0}', space=vmem, size = 0x8000, scoped, tag = 'output window, operand 1']
    #allocation9 [shape = 's32[2]{0}', space=sflag, size = 0x8, scoped, tag = 'scoped memory for tpu_custom_call.1']
    %9 = vsyncpa [#allocation3], 0
    %s10 = scalar_lea.sflag [#allocation3], 1
    %11 = vsyncpa %s10, 0
    %12 = vsyncpa [#allocation6], 0
    %s13 = scalar_lea.sflag [#allocation6], 1
    %14 = vsyncpa %s13, 0
    %15 = vsyncpa [#allocation4], 0
    %s16 = scalar_lea.sflag [#allocation4], 1
    %17 = vsyncpa %s16, 0
    %18 = vsyncpa [#allocation9], 0
    %s19 = scalar_lea.sflag [#allocation9], 1
    %20 = vsyncpa %s19, 0
    loop: start=0, step=1, limit=5
    $region2: #{tpu_custom_call.1} parent=1 // loop_pre_header
      _
    $region3: #{tpu_custom_call.1} parent=1 // loop_header
      %s22 = sphi 0, %s26
      %p23 = scmp.ge.s32.totalorder %s22, 5
      %s32 = sphi 0, %s34
      %s35 = sphi 0, %s32
      %s36 = sphi 0, %s35
      %s52 = sphi 0, %s36
      %s58 = sphi 0, %s60
      %s61 = sphi 0, %s58
      %s62 = sphi 0, %s61
      %s78 = sphi 0, %s62
      %s84 = sphi 0, %s86
      %s87 = sphi 0, %s84
      %s88 = sphi 0, %s87
      %s104 = sphi 0, %s88
      %s110 = sphi 0, %s112
      %s113 = sphi 0, %s110
      %s114 = sphi 0, %s113
      %s130 = sphi 0, %s114
    $region4: #{tpu_custom_call.1} parent=1 // loop_header_branch
      %25 = sbr.rel (%p23) target = $region8
    $region5: #{tpu_custom_call.1} parent=1 // loop_body
      %s27 = ssub.s32 %s22, 1
      %s28 = ssub.s32 %s22, 2
      %s29 = sadd.s32 %s22, 1
      %s30 = ssub.s32 %s22, %s29
      %p31 = scmp.eq.s32.totalorder %s30, 0
      %s33 = sadd.s32 %s32, 1
      %s34 = scalar_select %p31, %s32, %s33
      %p37 = pneg %p31
      %p38 = scmp.eq.s32.totalorder %s22, 2
      %p39 = por %p37, %p38
      %p40 = scmp.ne.s32.totalorder %s32, %s35
      %p41 = scmp.eq.s32.totalorder %s22, 0
      %p42 = por %p40, %p41
      %p43 = scmp.ne.s32.totalorder %s32, %s35
      %p44 = scmp.eq.s32.totalorder %s27, 2
      %p45 = por %p43, %p44
      %p46 = scmp.ne.s32.totalorder %s35, %s36
      %p47 = scmp.eq.s32.totalorder %s27, 0
      %p48 = por %p46, %p47
      %p49 = scmp.ne.s32.totalorder %s35, %s36
      %p50 = scmp.eq.s32.totalorder %s28, 2
      %p51 = por %p49, %p50
      %p53 = scmp.ne.s32.totalorder %s36, %s52
      %p54 = scmp.eq.s32.totalorder %s28, 0
      %p55 = por %p53, %p54
      %s56 = ssub.s32 %s22, %s29
      %p57 = scmp.eq.s32.totalorder %s56, 0
      %s59 = sadd.s32 %s58, 1
      %s60 = scalar_select %p57, %s58, %s59
      %p63 = pneg %p57
      %p64 = scmp.eq.s32.totalorder %s22, 2
      %p65 = por %p63, %p64
      %p66 = scmp.ne.s32.totalorder %s58, %s61
      %p67 = scmp.eq.s32.totalorder %s22, 0
      %p68 = por %p66, %p67
      %p69 = scmp.ne.s32.totalorder %s58, %s61
      %p70 = scmp.eq.s32.totalorder %s27, 2
      %p71 = por %p69, %p70
      %p72 = scmp.ne.s32.totalorder %s61, %s62
      %p73 = scmp.eq.s32.totalorder %s27, 0
      %p74 = por %p72, %p73
      %p75 = scmp.ne.s32.totalorder %s61, %s62
      %p76 = scmp.eq.s32.totalorder %s28, 2
      %p77 = por %p75, %p76
      %p79 = scmp.ne.s32.totalorder %s62, %s78
      %p80 = scmp.eq.s32.totalorder %s28, 0
      %p81 = por %p79, %p80
      %s82 = ssub.s32 %s22, %s29
      %p83 = scmp.eq.s32.totalorder %s82, 0
      %s85 = sadd.s32 %s84, 1
      %s86 = scalar_select %p83, %s84, %s85
      %p89 = pneg %p83
      %p90 = scmp.eq.s32.totalorder %s22, 2
      %p91 = por %p89, %p90
      %p92 = scmp.ne.s32.totalorder %s84, %s87
      %p93 = scmp.eq.s32.totalorder %s22, 0
      %p94 = por %p92, %p93
      %p95 = scmp.ne.s32.totalorder %s84, %s87
      %p96 = scmp.eq.s32.totalorder %s27, 2
      %p97 = por %p95, %p96
      %p98 = scmp.ne.s32.totalorder %s87, %s88
      %p99 = scmp.eq.s32.totalorder %s27, 0
      %p100 = por %p98, %p99
      %p101 = scmp.ne.s32.totalorder %s87, %s88
      %p102 = scmp.eq.s32.totalorder %s28, 2
      %p103 = por %p101, %p102
      %p105 = scmp.ne.s32.totalorder %s88, %s104
      %p106 = scmp.eq.s32.totalorder %s28, 0
      %p107 = por %p105, %p106
      %s108 = ssub.s32 %s22, %s29
      %p109 = scmp.eq.s32.totalorder %s108, 0
      %s111 = sadd.s32 %s110, 1
      %s112 = scalar_select %p109, %s110, %s111
      %p115 = pneg %p109
      %p116 = scmp.eq.s32.totalorder %s22, 2
      %p117 = por %p115, %p116
      %p118 = scmp.ne.s32.totalorder %s110, %s113
      %p119 = scmp.eq.s32.totalorder %s22, 0
      %p120 = por %p118, %p119
      %p121 = scmp.ne.s32.totalorder %s110, %s113
      %p122 = scmp.eq.s32.totalorder %s27, 2
      %p123 = por %p121, %p122
      %p124 = scmp.ne.s32.totalorder %s113, %s114
      %p125 = scmp.eq.s32.totalorder %s27, 0
      %p126 = por %p124, %p125
      %p127 = scmp.ne.s32.totalorder %s113, %s114
      %p128 = scmp.eq.s32.totalorder %s28, 2
      %p129 = por %p127, %p128
      %p131 = scmp.ne.s32.totalorder %s114, %s130
      %p132 = scmp.eq.s32.totalorder %s28, 0
      %p133 = por %p131, %p132
      %p134 = scmp.le.s32.totalorder 1, %s22
      %p135 = scmp.lt.s32.totalorder %s22, 4
      %p136 = pnand %p134, %p135
      %p137 = pneg %p136
      // Predicated region
      $region9: #{tpu_custom_call.1} parent=5 // pred_check
        _
      $region10: #{tpu_custom_call.1} parent=5 // pred_check_branch
        %139 = sbr.rel (%p136) target = $region12
      $region11: #{tpu_custom_call.1} parent=5 // pred_region
        %s140 = ssub.s32 %s22, 1
      $region12: #{tpu_custom_call.1} parent=5 // pred_fallthru
        _
      %p141 = scmp.lt.s32.totalorder %s22, 3
      // Predicated region
      $region13: #{tpu_custom_call.1} parent=5 // pred_check
        %p142 = pneg %p141
      $region14: #{tpu_custom_call.1} parent=5 // pred_check_branch
        %144 = sbr.rel (%p142) target = $region16
      $region15: #{tpu_custom_call.1} parent=5 // pred_region
        // Predicated region
        $region17: #{tpu_custom_call.1} parent=15 // pred_check
          %p145 = pneg %p42
        $region18: #{tpu_custom_call.1} parent=15 // pred_check_branch
          %147 = sbr.rel (%p145) target = $region20
        $region19: #{tpu_custom_call.1} parent=15 // pred_region
          %s148 = sand.u32 %s32, 1
          %s149 = scalar_lea.sflag [#allocation3], %s148
          %s150 = sand.u32 %s32, 1
          %s151 = smul.addr %s150, 32
          %s152 = scalar_lea.vmem [#allocation2], %s151
          %s153 = smul.u32 4, %s22
          %s154 = ssub.s32 9, %s153
          %p155 = scmp.lt.s32.totalorder %s154, 4
          %s156 = scalar_select %p155, %s154, 4
          %s157 = smul.u32 128, %s156
          %s159 = ssub.s32 512, %s157
          %160 = vsyncadd %s149, %s159
          %p161 = scmp.ne.s32.totalorder 0, %s157
          %s162 = smul.addr %s153, 128
          %s163 = scalar_lea.hbm %s0, %s162
          %s164 = smul.u32 8, %s156
          %s165 = sshll.u32 %s152, 4
          %s166 = int_to_ptr.vmem [resolvable:$true] %s165
          %s167 = sshll.u32 %s164, 4
          %171 = dma.hbm_to_vmem [thread:$0]  (%p161), %s163, %s167, %s166, %s149, 128, 128, 8
        $region20: #{tpu_custom_call.1} parent=15 // pred_fallthru
          _
        // Predicated region
        $region21: #{tpu_custom_call.1} parent=15 // pred_check
          %p172 = pneg %p68
        $region22: #{tpu_custom_call.1} parent=15 // pred_check_branch
          %174 = sbr.rel (%p172) target = $region24
        $region23: #{tpu_custom_call.1} parent=15 // pred_region
          %s175 = sand.u32 %s58, 1
          %s176 = scalar_lea.sflag [#allocation6], %s175
          %s177 = sand.u32 %s58, 1
          %s178 = smul.addr %s177, 8
          %s179 = scalar_lea.vmem [#allocation5], %s178
          %s180 = smul.u32 4, %s22
          %s181 = ssub.s32 9, %s180
          %p182 = scmp.lt.s32.totalorder %s181, 4
          %s183 = scalar_select %p182, %s181, 4
          %s184 = smul.u32 32, %s183
          %s186 = ssub.s32 128, %s184
          %187 = vsyncadd %s176, %s186
          %p188 = scmp.ne.s32.totalorder 0, %s184
          %s189 = smul.addr %s180, 32
          %s190 = scalar_lea.hbm %s1, %s189
          %s191 = smul.u32 2, %s183
          %s192 = sshll.u32 %s179, 4
          %s193 = int_to_ptr.vmem [resolvable:$true] %s192
          %s194 = sshll.u32 %s191, 4
          %198 = dma.hbm_to_vmem [thread:$0]  (%p188), %s190, %s194, %s193, %s176, 32, 32, 2
        $region24: #{tpu_custom_call.1} parent=15 // pred_fallthru
          _
      $region16: #{tpu_custom_call.1} parent=5 // pred_fallthru
        _
      %p199 = scmp.le.s32.totalorder 1, %s22
      %p200 = scmp.lt.s32.totalorder %s22, 4
      %p201 = pnand %p199, %p200
      %p202 = pneg %p201
      // Predicated region
      $region25: #{tpu_custom_call.1} parent=5 // pred_check
        _
      $region26: #{tpu_custom_call.1} parent=5 // pred_check_branch
        %204 = sbr.rel (%p201) target = $region28
      $region27: #{tpu_custom_call.1} parent=5 // pred_region
        %s205 = ssub.s32 %s22, 1
        %s206 = sand.u32 %s35, 1
        %s207 = scalar_lea.sflag [#allocation3], %s206
        %s208 = sand.u32 %s35, 1
        %s209 = smul.addr %s208, 32
        %s210 = scalar_lea.vmem [#allocation2], %s209
        // Predicated region
        $region29: #{tpu_custom_call.1} parent=27 // pred_check
          %p211 = pneg %p48
        $region30: #{tpu_custom_call.1} parent=27 // pred_check_branch
          %213 = sbr.rel (%p211) target = $region32
        $region31: #{tpu_custom_call.1} parent=27 // pred_region
          %214 = dma.done %s207, 512
        $region32: #{tpu_custom_call.1} parent=27 // pred_fallthru
          _
        %s215 = sand.u32 %s61, 1
        %s216 = scalar_lea.sflag [#allocation6], %s215
        %s217 = sand.u32 %s61, 1
        %s218 = smul.addr %s217, 8
        %s219 = scalar_lea.vmem [#allocation5], %s218
        // Predicated region
        $region33: #{tpu_custom_call.1} parent=27 // pred_check
          %p220 = pneg %p74
        $region34: #{tpu_custom_call.1} parent=27 // pred_check_branch
          %222 = sbr.rel (%p220) target = $region36
        $region35: #{tpu_custom_call.1} parent=27 // pred_region
          %223 = dma.done %s216, 128
        $region36: #{tpu_custom_call.1} parent=27 // pred_fallthru
          _
        %s224 = sand.u32 %s35, 1
        %s225 = scalar_lea.sflag [#allocation3], %s224
        %s226 = sand.u32 %s35, 1
        %s227 = smul.addr %s226, 32
        %s228 = scalar_lea.vmem [#allocation2], %s227
        %p229 = pneg %p48
        %p230 = pneg %p45
        %s231 = sand.u32 %s61, 1
        %s232 = scalar_lea.sflag [#allocation6], %s231
        %s233 = sand.u32 %s61, 1
        %s234 = smul.addr %s233, 8
        %s235 = scalar_lea.vmem [#allocation5], %s234
        %p236 = pneg %p74
        %p237 = pneg %p71
        %p238 = pneg %p100
        %p239 = pneg %p97
        %s240 = sand.u32 %s87, 1
        %s241 = scalar_lea.sflag [#allocation4], %s240
        %s242 = sand.u32 %s87, 1
        %s243 = smul.addr %s242, 32
        %s244 = scalar_lea.vmem [#allocation7], %s243
        %p245 = pneg %p126
        %p246 = pneg %p123
        %s247 = sand.u32 %s113, 1
        %s248 = scalar_lea.sflag [#allocation9], %s247
        %s249 = sand.u32 %s113, 1
        %s250 = smul.addr %s249, 32
        %s251 = scalar_lea.vmem [#allocation8], %s250
        %s252 = smul.u32 4, %s27
        %s253 = ssub.s32 9, %s252
        %p254 = scmp.lt.s32.totalorder %s253, 4
        %s255 = scalar_select %p254, %s253, 4
        %s256 = smul.u32 128, %s255
        %s257 = smul.u32 4, %s27
        %s258 = ssub.s32 9, %s257
        %p259 = scmp.lt.s32.totalorder %s258, 4
        %s260 = scalar_select %p259, %s258, 4
        %s261 = smul.u32 32, %s260
        %s262 = smul.u32 4, %s27
        %s263 = smul.u32 4, %s27
        %v264 = vld [vmem:[%s210] sm:$0xff]
        %v265 = vld [vmem:[%s210 + $0x8] sm:$0xff]
        %v266 = vld [vmem:[%s210 + $0x10] sm:$0xff]
        %v267 = vld [vmem:[%s210 + $0x18] sm:$0xff]
        %s268 = smul.u32 %s27, 32
        %v269 = vlaneseq
        %v270 = vshrl.u32 %v269, 7
        %v271 = vadd.s32 %v270, 8
        %v272 = vadd.s32 %v270, 16
        %v273 = vadd.s32 %v270, 24
        %v274 = vstv %s268
        %v275 = vadd.s32 %v274, %v270
        %v276 = vadd.s32 %v274, %v271
        %v277 = vadd.s32 %v274, %v272
        %v278 = vadd.s32 %v274, %v273
        %vm279 = vcmp.lt.s32.totalorder %v275, 71
        %vm280 = vcmp.lt.s32.totalorder %v276, 71
        %vm281 = vcmp.lt.s32.totalorder %v277, 71
        %vm282 = vcmp.lt.s32.totalorder %v278, 71
        %v283 = vsel %vm279, %v264, 0.0
        %v284 = vsel %vm280, %v265, 0.0
        %v285 = vsel %vm281, %v266, 0.0
        %v286 = vsel %vm282, %v267, 0.0
        %v287 = vand.u32 2147483647, %v283
        %v288 = vand.u32 2147483647, %v284
        %v289 = vand.u32 2147483647, %v285
        %v290 = vand.u32 2147483647, %v286
        %vm291 = vcmp.le.f32.partialorder %v287, 1e-08
        %vm292 = vcmp.le.f32.partialorder %v288, 1e-08
        %vm293 = vcmp.le.f32.partialorder %v289, 1e-08
        %vm294 = vcmp.le.f32.partialorder %v290, 1e-08
        %v295 = vsub.f32 %v283, 1.0
        %v296 = vsub.f32 %v284, 1.0
        %v297 = vsub.f32 %v285, 1.0
        %v298 = vsub.f32 %v286, 1.0
        %v299 = vand.u32 2147483647, %v295
        %v300 = vand.u32 2147483647, %v296
        %v301 = vand.u32 2147483647, %v297
        %v302 = vand.u32 2147483647, %v298
        %vm303 = vcmp.le.f32.partialorder %v299, 1.001e-05
        %vm304 = vcmp.le.f32.partialorder %v300, 1.001e-05
        %vm305 = vcmp.le.f32.partialorder %v301, 1.001e-05
        %vm306 = vcmp.le.f32.partialorder %v302, 1.001e-05
        %vm307 = vmor %vm291, %vm303
        %vm308 = vmor %vm292, %vm304
        %vm309 = vmor %vm293, %vm305
        %vm310 = vmor %vm294, %vm306
        %vm311 = vmxor %vm307, 1
        %vm312 = vmxor %vm308, 1
        %vm313 = vmxor %vm309, 1
        %vm314 = vmxor %vm310, 1
        %v315 = vld [vmem:[%s219] sm:$0x3]
        %v316 = vld [vmem:[%s219 + $0x2] sm:$0x3]
        %v317 = vld [vmem:[%s219 + $0x4] sm:$0x3]
        %v318 = vld [vmem:[%s219 + $0x6] sm:$0x3]
        %v319 = vunpack.c.0.s8 %v315
        %v320 = vunpack.c.0.s8 %v316
        %v321 = vunpack.c.0.s8 %v317
        %v322 = vunpack.c.0.s8 %v318
        %v323 = vand.u32 %v319, 1
        %v324 = vand.u32 %v320, 1
        %v325 = vand.u32 %v321, 1
        %v326 = vand.u32 %v322, 1
        %vm327 = vcmp.ne.s32.totalorder %v323, 0
        %vm328 = vcmp.ne.s32.totalorder %v324, 0
        %vm329 = vcmp.ne.s32.totalorder %v325, 0
        %vm330 = vcmp.ne.s32.totalorder %v326, 0
        %v331 = vsub.f32 1.0, %v283
        %v332 = vsub.f32 1.0, %v284
        %v333 = vsub.f32 1.0, %v285
        %v334 = vsub.f32 1.0, %v286
        %v335 = vsel %vm327, %v283, %v331
        %v336 = vsel %vm328, %v284, %v332
        %v337 = vsel %vm329, %v285, %v333
        %v338 = vsel %vm330, %v286, %v334
        %v339 = vshra.s32 %v319, 1
        %v340 = vshra.s32 %v320, 1
        %v341 = vshra.s32 %v321, 1
        %v342 = vshra.s32 %v322, 1
        %v343 = vcvt.s32.f32 %v339
        %v344 = vcvt.s32.f32 %v340
        %v345 = vcvt.s32.f32 %v341
        %v346 = vcvt.s32.f32 %v342
        %v347 = vmul.f32 %v343, -0.25
        %v348 = vmul.f32 %v344, -0.25
        %v349 = vmul.f32 %v345, -0.25
        %v350 = vmul.f32 %v346, -0.25
        %v351 = vsel %vm327, %v347, -0.75
        %v352 = vsel %vm328, %v348, -0.75
        %v353 = vsel %vm329, %v349, -0.75
        %v354 = vsel %vm330, %v350, -0.75
        %v355 = vsub.f32 1.0, %v335
        %v356 = vsub.f32 1.0, %v336
        %v357 = vsub.f32 1.0, %v337
        %v358 = vsub.f32 1.0, %v338
        %v359 = vmul.f32 %v355, %v355
        %v360 = vmul.f32 %v356, %v356
        %v361 = vmul.f32 %v357, %v357
        %v362 = vmul.f32 %v358, %v358
        %v363 = vmul.f32 %v351, %v359
        %v364 = vmul.f32 %v352, %v360
        %v365 = vmul.f32 %v353, %v361
        %v366 = vmul.f32 %v354, %v362
        %v367 = vlog2.pop %v335
        %v368 = vmul.f32 %v367, 0.6931472
        %v369 = vlog2.pop %v336
        %v370 = vmul.f32 %v369, 0.6931472
        %v371 = vlog2.pop %v337
        %v372 = vmul.f32 %v371, 0.6931472
        %v373 = vlog2.pop %v338
        %v374 = vmul.f32 %v373, 0.6931472
        %v375 = vmul.f32 %v363, %v368
        %v376 = vmul.f32 %v364, %v370
        %v377 = vmul.f32 %v365, %v372
        %v378 = vmul.f32 %v366, %v374
        %v379 = vsel %vm311, %v375, 0.0
        %v380 = vsel %vm312, %v376, 0.0
        %v381 = vsel %vm313, %v377, 0.0
        %v382 = vsel %vm314, %v378, 0.0
        %v383 = vadd.f32 %v379, 0.0
        %v384 = vadd.f32 %v380, 0.0
        %v385 = vadd.f32 %v381, 0.0
        %v386 = vadd.f32 %v382, 0.0
        %387 = vst [vmem:[%s244] sm:$0xff] %v383
        %388 = vst [vmem:[%s244 + $0x8] sm:$0xff] %v384
        %389 = vst [vmem:[%s244 + $0x10] sm:$0xff] %v385
        %390 = vst [vmem:[%s244 + $0x18] sm:$0xff] %v386
        %v391 = vsel %vm311, 1, 0
        %v392 = vsel %vm312, 1, 0
        %v393 = vsel %vm313, 1, 0
        %v394 = vsel %vm314, 1, 0
        %v395 = vcvt.s32.f32 %v391
        %v396 = vcvt.s32.f32 %v392
        %v397 = vcvt.s32.f32 %v393
        %v398 = vcvt.s32.f32 %v394
        %v399 = vadd.f32 %v395, 0.0
        %v400 = vadd.f32 %v396, 0.0
        %v401 = vadd.f32 %v397, 0.0
        %v402 = vadd.f32 %v398, 0.0
        %403 = vst [vmem:[%s251] sm:$0xff] %v399
        %404 = vst [vmem:[%s251 + $0x8] sm:$0xff] %v400
        %405 = vst [vmem:[%s251 + $0x10] sm:$0xff] %v401
        %406 = vst [vmem:[%s251 + $0x18] sm:$0xff] %v402
        %s407 = sand.u32 %s87, 1
        %s408 = scalar_lea.sflag [#allocation4], %s407
        %s409 = sand.u32 %s87, 1
        %s410 = smul.addr %s409, 32
        %s411 = scalar_lea.vmem [#allocation7], %s410
        %s412 = sand.u32 %s113, 1
        %s413 = scalar_lea.sflag [#allocation9], %s412
        %s414 = sand.u32 %s113, 1
        %s415 = smul.addr %s414, 32
        %s416 = scalar_lea.vmem [#allocation8], %s415
        // Predicated region
        $region37: #{tpu_custom_call.1} parent=27 // pred_check
          %p417 = pneg %p97
        $region38: #{tpu_custom_call.1} parent=27 // pred_check_branch
          %419 = sbr.rel (%p417) target = $region40
        $region39: #{tpu_custom_call.1} parent=27 // pred_region
          %s420 = smul.u32 4, %s27
          %s422 = ssub.s32 512, 512
          %423 = vsyncadd %s408, %s422
          %s424 = smul.addr %s420, 128
          %s425 = scalar_lea.hbm %s2, %s424
          %s426 = sshll.u32 %s411, 4
          %s427 = int_to_ptr.vmem [resolvable:$true] %s426
          %432 = dma.vmem_to_hbm [thread:$0]  %s427, 512, %s425, %s408, 128, 128, 8
        $region40: #{tpu_custom_call.1} parent=27 // pred_fallthru
          _
        // Predicated region
        $region41: #{tpu_custom_call.1} parent=27 // pred_check
          %p433 = pneg %p123
        $region42: #{tpu_custom_call.1} parent=27 // pred_check_branch
          %435 = sbr.rel (%p433) target = $region44
        $region43: #{tpu_custom_call.1} parent=27 // pred_region
          %s436 = smul.u32 4, %s27
          %s438 = ssub.s32 512, 512
          %439 = vsyncadd %s413, %s438
          %s440 = smul.addr %s436, 128
          %s441 = scalar_lea.hbm %s3, %s440
          %s442 = sshll.u32 %s416, 4
          %s443 = int_to_ptr.vmem [resolvable:$true] %s442
          %448 = dma.vmem_to_hbm [thread:$0]  %s443, 512, %s441, %s413, 128, 128, 8
        $region44: #{tpu_custom_call.1} parent=27 // pred_fallthru
          _
      $region28: #{tpu_custom_call.1} parent=5 // pred_fallthru
        _
      %p449 = scmp.le.s32.totalorder 2, %s22
      // Predicated region
      $region45: #{tpu_custom_call.1} parent=5 // pred_check
        %p450 = pneg %p449
      $region46: #{tpu_custom_call.1} parent=5 // pred_check_branch
        %452 = sbr.rel (%p450) target = $region48
      $region47: #{tpu_custom_call.1} parent=5 // pred_region
        %s453 = ssub.s32 %s22, 2
        // Predicated region
        $region49: #{tpu_custom_call.1} parent=47 // pred_check
          %p454 = pneg %p103
        $region50: #{tpu_custom_call.1} parent=47 // pred_check_branch
          %456 = sbr.rel (%p454) target = $region52
        $region51: #{tpu_custom_call.1} parent=47 // pred_region
          %s457 = sand.u32 %s88, 1
          %s458 = scalar_lea.sflag [#allocation4], %s457
          %s459 = sand.u32 %s88, 1
          %s460 = smul.addr %s459, 32
          %s461 = scalar_lea.vmem [#allocation7], %s460
          %462 = dma.done %s458, 512
        $region52: #{tpu_custom_call.1} parent=47 // pred_fallthru
          _
        // Predicated region
        $region53: #{tpu_custom_call.1} parent=47 // pred_check
          %p463 = pneg %p129
        $region54: #{tpu_custom_call.1} parent=47 // pred_check_branch
          %465 = sbr.rel (%p463) target = $region56
        $region55: #{tpu_custom_call.1} parent=47 // pred_region
          %s466 = sand.u32 %s114, 1
          %s467 = scalar_lea.sflag [#allocation9], %s466
          %s468 = sand.u32 %s114, 1
          %s469 = smul.addr %s468, 32
          %s470 = scalar_lea.vmem [#allocation8], %s469
          %471 = dma.done %s467, 512
        $region56: #{tpu_custom_call.1} parent=47 // pred_fallthru
          _
      $region48: #{tpu_custom_call.1} parent=5 // pred_fallthru
        _
    $region6: #{tpu_custom_call.1} parent=1 // loop_footer
      %s26 = sadd.s32 1, %s22
    $region7: #{tpu_custom_call.1} parent=1 // loop_footer_branch
      %21 = sbr.rel target = $region3
    $region8: #{tpu_custom_call.1} parent=1 // loop_exit
      _
    %472 = vsyncpa [#allocation3], 1
    %s473 = scalar_lea.sflag [#allocation3], 1
    %474 = vsyncpa %s473, 1
    %475 = vsyncpa [#allocation6], 1
    %s476 = scalar_lea.sflag [#allocation6], 1
    %477 = vsyncpa %s476, 1
    %478 = vsyncpa [#allocation4], 1
    %s479 = scalar_lea.sflag [#allocation4], 1
    %480 = vsyncpa %s479, 1
    %481 = vsyncpa [#allocation9], 1
    %s482 = scalar_lea.sflag [#allocation9], 1
    %483 = vsyncpa %s482, 1

</llo_original>
